<compile_context>
chip_gen: v7x
topology: tpu7x:2x2x1
jax: 0.10.0
libtpu: 0.0.40
codegen_flags: <defaults>
</compile_context>

<pallas_src>
import functools

import jax
import jax.numpy as jnp
from jax import lax
from jax.experimental import pallas as pl
from jax.experimental.pallas import tpu as pltpu


def _round_up(x, m):
    return ((x + m - 1) // m) * m


def _cdiv(a, b):
    return (a + b - 1) // b


def _contrastive_kernel(o1_ref, o2_ref, t_ref, out_ref, *,
                        margin, eps, batch, block_rows):
    """One (block_rows, D) row tile -> one (8, 128) partial-sum output block."""
    i = pl.program_id(0)

    o1 = o1_ref[...].astype(jnp.float32)
    o2 = o2_ref[...].astype(jnp.float32)
    diff = o2 - o1
    dist = jnp.sum(diff * diff, axis=1, keepdims=True)             # (TB, 1)

    t = t_ref[...]                                                 # (TB, 1) f32
    hinge = jnp.maximum(margin - jnp.sqrt(dist + eps), 0.0)
    losses = 0.5 * (t * dist + (1.0 - t) * (hinge * hinge))        # (TB, 1)

    if batch % block_rows != 0:
        # Ragged tail tile: the OOB part of the block buffer is undefined, so
        # zero its contribution instead of padding/copying the inputs in HBM.
        row = lax.broadcasted_iota(jnp.int32, losses.shape, 0) + i * block_rows
        losses = jnp.where(row < batch, losses, 0.0)

    blk_sum = jnp.sum(losses)                                      # scalar

    # Lane-dense (8, 128) partial-sum block: value at [0, 0], zeros elsewhere,
    # so the wrapper's jnp.sum over the whole output is exact.
    r = lax.broadcasted_iota(jnp.int32, (8, 128), 0)
    c = lax.broadcasted_iota(jnp.int32, (8, 128), 1)
    out_ref[...] = jnp.where((r == 0) & (c == 0), blk_sum, 0.0)


def contrastive_loss(output1, output2, target, *, margin=1.0, eps=1e-9,
                     size_average=True, block_rows=None):
    """output1/output2: (B, D) float; target: (B,) {0,1}. Returns f32 scalar."""
    B, D = output1.shape
    itemsize = output1.dtype.itemsize

    # Generation-aware VMEM budget (v5e/v6e: 128 MiB, v7x: 64 MiB per TC).
    try:
        vmem_cap = int(pltpu.get_tpu_info().vmem_capacity_bytes)
    except Exception:
        vmem_cap = 64 * 1024 * 1024
    # Total budget for the double-buffered (2 inputs x 2 buffers) row tiles.
    budget = min(int(vmem_cap * 0.6), 96 * 1024 * 1024)

    if block_rows is None:
        per_tile_bytes = 4 * 1024 * 1024          # ~4 MiB per input tile
        row_bytes = max(D * itemsize, 1)
        tb = per_tile_bytes // row_bytes
        tb = min(tb, budget // (4 * row_bytes))   # 2 inputs x 2 buffers
        tb = max(8, (tb // 8) * 8)
        # Keep at least two blocks when possible so the "parallel" grid axis
        # can shard the batch across both v7x TensorCores.
        tb = min(tb, _round_up(_cdiv(B, 2), 8), _round_up(B, 8))
        tb = max(tb, 8)
    else:
        tb = max(8, _round_up(block_rows, 8))
    if tb >= B:
        tb = B                                    # single full-extent block

    grid = _cdiv(B, tb)

    t = target.astype(jnp.float32).reshape(B, 1)

    kernel = functools.partial(
        _contrastive_kernel, margin=float(margin), eps=float(eps),
        batch=B, block_rows=tb)

    # Explicit scoped-VMEM limit sized to the actual double-buffered footprint
    # (inputs + lane-padded target blocks + output blocks) plus headroom.
    needed = 4 * tb * D * itemsize + 2 * _round_up(tb, 8) * 128 * 4 + 4 * 8 * 128 * 4
    vmem_limit = int(min(vmem_cap, max(needed + (8 << 20), 32 << 20)))

    partials = pl.pallas_call(
        kernel,
        grid=(grid,),
        in_specs=[
            pl.BlockSpec((tb, D), lambda i: (i, 0)),
            pl.BlockSpec((tb, D), lambda i: (i, 0)),
            pl.BlockSpec((tb, 1), lambda i: (i, 0)),
        ],
        out_specs=pl.BlockSpec((8, 128), lambda i: (0, i)),
        out_shape=jax.ShapeDtypeStruct((8, 128 * grid), jnp.float32),
        compiler_params=pltpu.CompilerParams(
            dimension_semantics=("parallel",),
            vmem_limit_bytes=vmem_limit),
    )(output1, output2, t)

    total = jnp.sum(partials)                     # tiny final reduce on host side
    scale = (1.0 / B) if size_average else 1.0
    return total * scale


def _reference(output1, output2, target, margin, eps=1e-9, size_average=True):
    tf = target.astype(jnp.float32)
    distances = jnp.sum((output2 - output1) ** 2, axis=1)
    hinge = jnp.maximum(margin - jnp.sqrt(distances + eps), 0.0)
    losses = 0.5 * (tf * distances + (1.0 - tf) * hinge * hinge)
    return losses.mean() if size_average else losses.sum()


if __name__ == "__main__":
    key = jax.random.PRNGKey(0)
    k1, k2, k3 = jax.random.split(key, 3)
    margin = 1.0

    # Small shapes consistent with the module: batch=8, hidden=32.
    B, D = 8, 32
    output1 = jax.random.normal(k1, (B, D), dtype=jnp.float32)
    output2 = jax.random.normal(k2, (B, D), dtype=jnp.float32)
    target = jax.random.randint(k3, (B,), 0, 2, dtype=jnp.int32)

    loss = contrastive_loss(output1, output2, target, margin=margin)
    jax.block_until_ready(loss)
    ref = _reference(output1, output2, target, margin)
    assert jnp.allclose(loss, ref, rtol=1e-5, atol=1e-6), (loss, ref)

    # size_average=False (sum) path.
    loss_s = contrastive_loss(output1, output2, target, margin=margin,
                              size_average=False)
    jax.block_until_ready(loss_s)
    ref_s = _reference(output1, output2, target, margin, size_average=False)
    assert jnp.allclose(loss_s, ref_s, rtol=1e-5, atol=1e-6), (loss_s, ref_s)

    # Multi-tile grid with explicit block_rows + masked ragged tail (B=20 -> 3
    # tiles of 8 with the last 4 rows masked in-kernel; no host-side padding).
    B2, D2 = 20, 64
    o1b = jax.random.normal(k1, (B2, D2), dtype=jnp.float32)
    o2b = jax.random.normal(k2, (B2, D2), dtype=jnp.float32)
    tgt2 = jax.random.randint(k3, (B2,), 0, 2, dtype=jnp.int32)
    loss2 = contrastive_loss(o1b, o2b, tgt2, margin=margin, block_rows=8)
    jax.block_until_ready(loss2)
    ref2 = _reference(o1b, o2b, tgt2, margin)
    assert jnp.allclose(loss2, ref2, rtol=1e-5, atol=1e-6), (loss2, ref2)

    # Auto tile sizing + parallel partial-sum path (2 blocks, ragged tail).
    B3, D3 = 300, 128
    o1c = jax.random.normal(k1, (B3, D3), dtype=jnp.float32)
    o2c = jax.random.normal(k2, (B3, D3), dtype=jnp.float32)
    tgt3 = jax.random.randint(k3, (B3,), 0, 2, dtype=jnp.int32)
    loss3 = contrastive_loss(o1c, o2c, tgt3, margin=margin)
    jax.block_until_ready(loss3)
    ref3 = _reference(o1c, o2c, tgt3, margin)
    assert jnp.allclose(loss3, ref3, rtol=1e-5, atol=1e-5), (loss3, ref3)

    print("KERNEL_OK")
</pallas_src>

<mosaic_0001>
module attributes {stable_mosaic.version = 11 : i64} {
  func.func @_contrastive_kernel(%arg0: i32, %arg1: memref<8x32xf32, #tpu.memory_space<vmem>>, %arg2: memref<8x32xf32, #tpu.memory_space<vmem>>, %arg3: memref<8x1xf32, #tpu.memory_space<vmem>>, %arg4: memref<8x128xf32, #tpu.memory_space<vmem>>) attributes {dimension_semantics = [#tpu.dimension_semantics<parallel>], iteration_bounds = array<i64: 1>, scalar_prefetch = 0 : i64, scratch_operands = 0 : i64, tpu.core_type = #tpu.core_type<tc>, window_params = [{transform_indices = @transform_0, window_bounds = array<i64: 8, 32>}, {transform_indices = @transform_1, window_bounds = array<i64: 8, 32>}, {transform_indices = @transform_2, window_bounds = array<i64: 8, 1>}, {transform_indices = @transform_3, window_bounds = array<i64: 8, 128>}]} {
    %c0 = arith.constant 0 : index
    %c0_0 = arith.constant 0 : index
    %0 = vector.load %arg1[%c0, %c0_0] : memref<8x32xf32, #tpu.memory_space<vmem>>, vector<8x32xf32>
    %c0_1 = arith.constant 0 : index
    %c0_2 = arith.constant 0 : index
    %1 = vector.load %arg2[%c0_1, %c0_2] : memref<8x32xf32, #tpu.memory_space<vmem>>, vector<8x32xf32>
    %2 = arith.subf %1, %0 : vector<8x32xf32>
    %3 = arith.mulf %2, %2 : vector<8x32xf32>
    %cst = arith.constant dense<0.000000e+00> : vector<8xf32>
    %4 = vector.multi_reduction <add>, %3, %cst [1] : vector<8x32xf32> to vector<8xf32>
    %5 = vector.shape_cast %4 : vector<8xf32> to vector<8x1xf32>
    %c0_3 = arith.constant 0 : index
    %c0_4 = arith.constant 0 : index
    %6 = vector.load %arg3[%c0_3, %c0_4] : memref<8x1xf32, #tpu.memory_space<vmem>>, vector<8x1xf32>
    %cst_5 = arith.constant 9.99999971E-10 : f32
    %7 = vector.broadcast %cst_5 : f32 to vector<8x1xf32>
    %8 = arith.addf %5, %7 : vector<8x1xf32>
    %9 = math.sqrt %8 : vector<8x1xf32>
    %cst_6 = arith.constant 1.000000e+00 : f32
    %10 = vector.broadcast %cst_6 : f32 to vector<8x1xf32>
    %11 = arith.subf %10, %9 : vector<8x1xf32>
    %cst_7 = arith.constant 0.000000e+00 : f32
    %12 = vector.broadcast %cst_7 : f32 to vector<8x1xf32>
    %13 = arith.maximumf %11, %12 : vector<8x1xf32>
    %14 = arith.mulf %6, %5 : vector<8x1xf32>
    %cst_8 = arith.constant 1.000000e+00 : f32
    %15 = vector.broadcast %cst_8 : f32 to vector<8x1xf32>
    %16 = arith.subf %15, %6 : vector<8x1xf32>
    %17 = arith.mulf %13, %13 : vector<8x1xf32>
    %18 = arith.mulf %16, %17 : vector<8x1xf32>
    %19 = arith.addf %14, %18 : vector<8x1xf32>
    %cst_9 = arith.constant 5.000000e-01 : f32
    %20 = vector.broadcast %cst_9 : f32 to vector<8x1xf32>
    %21 = arith.mulf %20, %19 : vector<8x1xf32>
    %22 = vector.shape_cast %21 : vector<8x1xf32> to vector<1x8x1xf32>
    %cst_10 = arith.constant dense<0.000000e+00> : vector<1xf32>
    %23 = vector.multi_reduction <add>, %22, %cst_10 [1, 2] : vector<1x8x1xf32> to vector<1xf32>
    %24 = vector.shape_cast %23 : vector<1xf32> to vector<1x1x1xf32>
    %25 = vector.extract %24[0, 0, 0] : f32 from vector<1x1x1xf32>
    %26 = tpu.iota {dimensions = array<i32: 0>} : vector<8x128xi32>
    %27 = tpu.iota {dimensions = array<i32: 1>} : vector<8x128xi32>
    %c0_i32 = arith.constant 0 : i32
    %28 = vector.broadcast %c0_i32 : i32 to vector<8x128xi32>
    %29 = arith.cmpi eq, %26, %28 : vector<8x128xi32>
    %c0_i32_11 = arith.constant 0 : i32
    %30 = vector.broadcast %c0_i32_11 : i32 to vector<8x128xi32>
    %31 = arith.cmpi eq, %27, %30 : vector<8x128xi32>
    %32 = arith.andi %29, %31 : vector<8x128xi1>
    %cst_12 = arith.constant 0.000000e+00 : f32
    %33 = vector.broadcast %25 : f32 to vector<8x128xf32>
    %34 = vector.broadcast %cst_12 : f32 to vector<8x128xf32>
    %35 = arith.select %32, %33, %34 : vector<8x128xi1>, vector<8x128xf32>
    %c0_13 = arith.constant 0 : index
    %c0_14 = arith.constant 0 : index
    %36 = vector.load %arg4[%c0_13, %c0_14] : memref<8x128xf32, #tpu.memory_space<vmem>>, vector<8x128xf32>
    tpu.vector_store %arg4[%c0_13, %c0_14], %35 {strides = array<i32>} : memref<8x128xf32, #tpu.memory_space<vmem>>, vector<8x128xf32>,
    return
  }
  func.func @transform_0(%arg0: i32) -> (i32, i32) {
    %c0_i32 = arith.constant 0 : i32
    %c0_i32_0 = arith.constant 0 : i32
    return %arg0, %c0_i32 : i32, i32
  }
  func.func @transform_1(%arg0: i32) -> (i32, i32) {
    %c0_i32 = arith.constant 0 : i32
    %c0_i32_0 = arith.constant 0 : i32
    return %arg0, %c0_i32 : i32, i32
  }
  func.func @transform_2(%arg0: i32) -> (i32, i32) {
    %c0_i32 = arith.constant 0 : i32
    %c0_i32_0 = arith.constant 0 : i32
    return %arg0, %c0_i32 : i32, i32
  }
  func.func @transform_3(%arg0: i32) -> (i32, i32) {
    %c0_i32 = arith.constant 0 : i32
    %c0_i32_0 = arith.constant 0 : i32
    return %c0_i32, %arg0 : i32, i32
  }
}

</mosaic_0001>

<llo_original>
// kernel: tpu_custom_call.1
$region0: #{tpu_custom_call.1}
  #allocation0 [shape = 'u32[]', space=smem, size = 0x4, offset = 0x4, fixed_abs, tag = 'smem constant byte address 0x4 - core index']
  #allocation1 [shape = 'u32[144,128]{1,0:T(1,128)}', space=vmem, size = 0x12000, scoped, tag = 'internal scratch']
  %s0 = inlined_call_operand.vmem [shape: f32[8,32], index: 0, kind: input, shape index: {}]
  %s1 = inlined_call_operand.hbm [shape: f32[8,32], index: 1, kind: input, shape index: {}]
  %s2 = inlined_call_operand.vmem [shape: f32[8,1], index: 2, kind: input, shape index: {}]
  %s3 = inlined_call_operand.hbm [shape: f32[8,128], index: 3, kind: output, shape index: {}]
  %s4 = sld [smem:[#allocation0]]
  $region26: #{tpu_custom_call.1} parent=0
    _
  %s6 = ssub.s32 1, %s4
  %s7 = scalar_select 0, %s6, %s4
  $region1: #{tpu_custom_call.1} parent=0
    #allocation2 [shape = 'u8[4096]{0}', space=vmem, size = 0x1000, scoped, tag = 'input window, operand 1, single buffered']
    #allocation3 [shape = 's32[1]{0}', space=sflag, size = 0x4, scoped, tag = 'scoped memory for tpu_custom_call.1']
    #allocation4 [shape = 's32[1]{0}', space=sflag, size = 0x4, scoped, tag = 'scoped memory for tpu_custom_call.1']
    #allocation5 [shape = 'u8[4096]{0}', space=vmem, size = 0x1000, scoped, tag = 'output window, operand 0, single buffered']
    %8 = vsyncpa [#allocation3], 0
    %9 = vsyncpa [#allocation4], 0
    // Predicated region
    $region2: #{tpu_custom_call.1} parent=1 // pred_check
      _
    $region3: #{tpu_custom_call.1} parent=1 // pred_check_branch
      %11 = sbr.rel (0) target = $region5
    $region4: #{tpu_custom_call.1} parent=1 // pred_region
      _
    $region5: #{tpu_custom_call.1} parent=1 // pred_fallthru
      _
    // Predicated region
    $region6: #{tpu_custom_call.1} parent=1 // pred_check
      _
    $region7: #{tpu_custom_call.1} parent=1 // pred_check_branch
      %13 = sbr.rel (0) target = $region9
    $region8: #{tpu_custom_call.1} parent=1 // pred_region
      %s15 = ssub.s32 128, 128
      %16 = vsyncadd [#allocation3], %s15
      %s18 = sshll.u32 [#allocation2], 4
      %s19 = int_to_ptr.vmem [resolvable:$true] %s18
      %21 = dma.hbm_to_vmem [thread:$0]  %s1, 128, %s19, [#allocation3]
    $region9: #{tpu_custom_call.1} parent=1 // pred_fallthru
      _
    // Predicated region
    $region10: #{tpu_custom_call.1} parent=1 // pred_check
      _
    $region11: #{tpu_custom_call.1} parent=1 // pred_check_branch
      %23 = sbr.rel (0) target = $region13
    $region12: #{tpu_custom_call.1} parent=1 // pred_region
      _
    $region13: #{tpu_custom_call.1} parent=1 // pred_fallthru
      _
    // Predicated region
    $region14: #{tpu_custom_call.1} parent=1 // pred_check
      _
    $region15: #{tpu_custom_call.1} parent=1 // pred_check_branch
      %25 = sbr.rel (0) target = $region17
    $region16: #{tpu_custom_call.1} parent=1 // pred_region
      %26 = dma.done [#allocation3], 128
    $region17: #{tpu_custom_call.1} parent=1 // pred_fallthru
      _
    %v27 = vld [vmem:[%s0] sm:$0xff]
    %v28 = vld [vmem:[#allocation2] sm:$0xff]
    %v29 = vsub.f32 %v28, %v27
    %v30 = vmul.f32 %v29, %v29
    %vm31 = vcmask 261120
    %v32 = vsel %vm31, %v30, 0.0
    %33 = vadd.xlane.f32.xlu0 %v32
    %v34 = vpop.xlane.xlu0 %33
    %v35 = vld [vmem:[%s2] sm:$0xff]
    %v36 = vadd.f32 %v34, 1e-09
    %v37 = vrsqrt.pop %v36
    %v38 = vmul.f32 %v36, %v37
    %vm39 = vcmp.eq.f32.partialorder %v36, inf
    %v40 = vsel %vm39, %v36, %v38
    %vm41 = vcmp.eq.f32.partialorder %v36, 0.0
    %v42 = vand.u32 %v36, 2147483648
    %v43 = vsel %vm41, %v42, %v40
    %v44 = vsub.f32 1.0, %v43
    %v45 = vmax.f32 %v44, 0.0
    %v46 = vmul.f32 %v35, %v34
    %v47 = vsub.f32 1.0, %v35
    %v48 = vmul.f32 %v45, %v45
    %v49 = vmul.f32 %v47, %v48
    %v50 = vadd.f32 %v46, %v49
    %v51 = vmul.f32 %v50, 0.5
    %vm52 = vcmask 7168
    %v53 = vsel %vm52, %v51, 0.0
    %54 = vadd.xlane.f32.xlu0 %v53
    %v55 = vpop.xlane.xlu0 %54
    %v56 = vrot.slane %v55, 4
    %v57 = vadd.f32 %v55, %v56
    %v58 = vrot.slane %v57, 2
    %v59 = vadd.f32 %v57, %v58
    %v60 = vrot.slane %v59, 1
    %v61 = vadd.f32 %v59, %v60
    %s62 = vtos %v61
    %v63 = vlaneseq
    %v64 = vshrl.u32 %v63, 7
    %v65 = vlaneseq
    %v66 = vand.u32 %v65, 127
    %vm67 = vcmp.eq.s32.totalorder %v64, 0
    %vm68 = vcmp.eq.s32.totalorder %v66, 0
    %vm69 = vmand %vm67, %vm68
    %v70 = vstv %s62
    %v71 = vsel %vm69, %v70, 0.0
    %72 = vst [vmem:[#allocation5] sm:$0xff] %v71
    // Predicated region
    $region18: #{tpu_custom_call.1} parent=1 // pred_check
      _
    $region19: #{tpu_custom_call.1} parent=1 // pred_check_branch
      %74 = sbr.rel (0) target = $region21
    $region20: #{tpu_custom_call.1} parent=1 // pred_region
      %s76 = ssub.s32 128, 128
      %77 = vsyncadd [#allocation4], %s76
      %s79 = sshll.u32 [#allocation5], 4
      %s80 = int_to_ptr.vmem [resolvable:$true] %s79
      %82 = dma.vmem_to_hbm [thread:$0]  %s80, 128, %s3, [#allocation4]
    $region21: #{tpu_custom_call.1} parent=1 // pred_fallthru
      _
    // Predicated region
    $region22: #{tpu_custom_call.1} parent=1 // pred_check
      _
    $region23: #{tpu_custom_call.1} parent=1 // pred_check_branch
      %84 = sbr.rel (0) target = $region25
    $region24: #{tpu_custom_call.1} parent=1 // pred_region
      %85 = dma.done [#allocation4], 128
    $region25: #{tpu_custom_call.1} parent=1 // pred_fallthru
      _
    %86 = vsyncpa [#allocation3], 1
    %87 = vsyncpa [#allocation4], 1

</llo_original>
